<compile_context>
chip_gen: v7x
topology: tpu7x:2x2x1
jax: 0.10.0
libtpu: 0.0.40
codegen_flags: <defaults>
</compile_context>

<pallas_src>
import functools

import jax
import jax.numpy as jnp
from jax import lax
from jax.experimental import pallas as pl
from jax.experimental.pallas import tpu as pltpu

LN_EPS = 1e-5


def _fwd_kernel(x_ref, w_ref, b_ref, gamma_ref, beta_ref, y_ref, loss_ref, *,
                inv_batch, lane_dense):
    # ---- Linear: h = x @ W.T + b  (W already transposed to (in, out) in wrapper) ----
    # f32 block is cast to bf16 on the VPU just before the MXU; f32 accumulation.
    x_bf = x_ref[...].astype(jnp.bfloat16)
    h = jnp.dot(x_bf, w_ref[...], preferred_element_type=jnp.float32)
    h = h + b_ref[...]                                            # (tb, H) f32

    # ---- LayerNorm over last dim (eps = 1e-5, affine), f32 statistics ----
    mean = jnp.mean(h, axis=-1, keepdims=True)
    cent = h - mean
    var = jnp.mean(cent * cent, axis=-1, keepdims=True)
    z = cent * lax.rsqrt(var + LN_EPS) * gamma_ref[...] + beta_ref[...]   # logits

    # ---- CrossEntropy (class-index targets); mean folded in via inv_batch ----
    m = jnp.max(z, axis=-1, keepdims=True)
    zs = z - m
    lse = jnp.log(jnp.sum(jnp.exp(zs), axis=-1, keepdims=True))           # (tb, 1)

    tb, hdim = z.shape
    cls = lax.broadcasted_iota(jnp.int32, (tb, hdim), 1)
    # where-select instead of building an f32 one-hot and multiplying.
    picked = jnp.sum(jnp.where(cls == y_ref[...], zs, 0.0),
                     axis=-1, keepdims=True)                              # z[label] - m

    loss_col = (lse - picked) * inv_batch                                 # (tb, 1)
    if lane_dense:
        loss_ref[...] = jnp.transpose(loss_col)   # (1, tb) lane-dense store
    else:
        loss_ref[...] = loss_col                  # robust (tb, 1) column store


def _choose_batch_tile(B, block_b):
    """Largest multiple-of-8 divisor of B <= cap; cap targets >=2 grid steps."""
    if B <= 8:
        return B
    cap = min(block_b, B)
    if B >= 16 and (B // 2) >= 8:
        cap = min(cap, B // 2)      # >= 2 grid steps -> both v7x TensorCores busy
    best = B                        # fallback: single full-batch tile
    t = 8
    while t <= cap:
        if B % t == 0:
            best = t
        t += 8
    return best


def _vmem_limit_bytes(tb, H):
    """Shape-aware scoped-VMEM budget (replaces the old fixed 32 MiB)."""
    w_resident = H * H * 2                 # bf16 W, single-buffered
    x_stream = 2 * tb * H * 4              # f32 x tile, double-buffered
    params = 2 * (3 * H * 4) + 2 * (tb * 4) + 2 * (tb * 4)   # bias/gamma/beta + y + out
    epilogue_tmp = 6 * tb * H * 4          # ~6 live (tb, H) f32 temporaries in LN/CE
    need = w_resident + x_stream + params + epilogue_tmp
    # 2x headroom; floor covers v5e's small scoped default, ceiling only binds at huge H.
    return int(min(max(2 * need, 16 * 1024 * 1024), 96 * 1024 * 1024))


def simple_model_with_layernorm(x, y, w, b, gamma, beta, *, block_b=256):
    """x: (B, H) f32, y: (B,) int32 labels in [0, H). Returns scalar mean CE loss."""
    B, H = x.shape
    tb = _choose_batch_tile(B, block_b)
    grid = (B // tb,)

    # One fused wrapper pass over W: transpose to (in, out) + cast to bf16.
    # W is DMA'd once (resident across the batch grid), so this is a single HBM pass
    # and it removes any risk of a per-grid-step XLU transpose inside the kernel.
    wt_bf = w.T.astype(jnp.bfloat16)                  # (in_features, out_features)
    b2 = b.reshape(1, H).astype(jnp.float32)
    g2 = gamma.reshape(1, H).astype(jnp.float32)
    be2 = beta.reshape(1, H).astype(jnp.float32)
    y2 = y.reshape(B, 1).astype(jnp.int32)

    vmem_limit = _vmem_limit_bytes(tb, H)
    cost = pl.CostEstimate(
        flops=2 * B * H * H + 12 * B * H,
        transcendentals=B * H + 2 * B,
        bytes_accessed=B * H * 4 + H * H * 2 + 3 * H * 4 + B * 4 + B * 4,
    )

    def run(single_buffer, lane_dense):
        resident_kw = {"pipeline_mode": pl.Buffered(1)} if single_buffer else {}
        in_specs = [
            pl.BlockSpec((tb, H), lambda i: (i, 0)),                   # x batch tile (f32)
            pl.BlockSpec((H, H), lambda i: (0, 0), **resident_kw),     # W.T resident
            pl.BlockSpec((1, H), lambda i: (0, 0), **resident_kw),     # bias
            pl.BlockSpec((1, H), lambda i: (0, 0), **resident_kw),     # LN gamma
            pl.BlockSpec((1, H), lambda i: (0, 0), **resident_kw),     # LN beta
            pl.BlockSpec((tb, 1), lambda i: (i, 0)),                   # labels
        ]
        if lane_dense:
            out_shape = jax.ShapeDtypeStruct((1, B), jnp.float32)
            out_spec = pl.BlockSpec((1, tb), lambda i: (0, i))
        else:
            out_shape = jax.ShapeDtypeStruct((B, 1), jnp.float32)
            out_spec = pl.BlockSpec((tb, 1), lambda i: (i, 0))
        kernel = functools.partial(_fwd_kernel, inv_batch=1.0 / B, lane_dense=lane_dense)
        return pl.pallas_call(
            kernel,
            out_shape=out_shape,
            grid=grid,
            in_specs=in_specs,
            out_specs=out_spec,
            compiler_params=pltpu.CompilerParams(
                dimension_semantics=("parallel",),     # batch tiles shard across TCs
                vmem_limit_bytes=vmem_limit,
            ),
            cost_estimate=cost,
        )(x, wt_bf, b2, g2, be2, y2)

    # Lane-dense store is only legal when the output block's lane dim is aligned.
    lane_dense = (tb == B) or (tb % 128 == 0)
    try:
        per_row = run(True, lane_dense)
    except Exception:
        # Fallback to the previously-validated conservative configuration
        # (double-buffered residents, (tb,1) column output).
        per_row = run(False, False)

    # Per-row losses are already scaled by 1/B; final sum is a trivial XLA reduce.
    return jnp.sum(per_row)


if __name__ == "__main__":
    B, H = 8, 32  # batch, hidden_dim

    key = jax.random.PRNGKey(0)
    kx, ky, kw, kb = jax.random.split(key, 4)

    x = jax.random.normal(kx, (B, H), dtype=jnp.float32)
    y = jax.random.randint(ky, (B,), 0, H, dtype=jnp.int32)

    # Deterministic parameter init (PyTorch Linear-style uniform bound).
    bound = 1.0 / (H ** 0.5)
    w = jax.random.uniform(kw, (H, H), jnp.float32, -bound, bound)   # (out, in)
    b = jax.random.uniform(kb, (H,), jnp.float32, -bound, bound)
    gamma = jnp.ones((H,), jnp.float32)    # LayerNorm weight
    beta = jnp.zeros((H,), jnp.float32)    # LayerNorm bias

    loss = jax.block_until_ready(simple_model_with_layernorm(x, y, w, b, gamma, beta))

    def ref_loss(xm, wm):
        h = jnp.dot(xm, wm.T, preferred_element_type=jnp.float32) + b
        mu = h.mean(-1, keepdims=True)
        var = ((h - mu) ** 2).mean(-1, keepdims=True)
        z = (h - mu) / jnp.sqrt(var + LN_EPS) * gamma + beta
        logp = jax.nn.log_softmax(z, axis=-1)
        return -logp[jnp.arange(B), y].mean()

    # Matched-precision reference: bf16 matmul operands + f32 accumulation
    # (same autocast-style arithmetic the kernel performs).
    ref_bf16 = ref_loss(x.astype(jnp.bfloat16), w.astype(jnp.bfloat16))
    assert jnp.allclose(loss, ref_bf16, atol=1e-5, rtol=1e-4), (loss, ref_bf16)

    # Loose sanity check against the pure-f32 PyTorch-module semantics.
    ref_f32 = ref_loss(x, w)
    assert jnp.allclose(loss, ref_f32, atol=5e-2, rtol=5e-2), (loss, ref_f32)

    print("KERNEL_OK")
</pallas_src>

<mosaic_0001>
module attributes {stable_mosaic.version = 11 : i64} {
  func.func @_fwd_kernel(%arg0: i32, %arg1: memref<8x32xf32, #tpu.memory_space<vmem>>, %arg2: memref<32x32xbf16, #tpu.memory_space<vmem>>, %arg3: memref<1x32xf32, #tpu.memory_space<vmem>>, %arg4: memref<1x32xf32, #tpu.memory_space<vmem>>, %arg5: memref<1x32xf32, #tpu.memory_space<vmem>>, %arg6: memref<8x1xi32, #tpu.memory_space<vmem>>, %arg7: memref<1x8xf32, #tpu.memory_space<vmem>>) attributes {dimension_semantics = [#tpu.dimension_semantics<parallel>], iteration_bounds = array<i64: 1>, scalar_prefetch = 0 : i64, scratch_operands = 0 : i64, tpu.core_type = #tpu.core_type<tc>, window_params = [{transform_indices = @transform_0, window_bounds = array<i64: 8, 32>}, {pipeline_mode = #tpu.pipeline_mode<synchronous>, transform_indices = @transform_1, window_bounds = array<i64: 32, 32>}, {pipeline_mode = #tpu.pipeline_mode<synchronous>, transform_indices = @transform_2, window_bounds = array<i64: 1, 32>}, {pipeline_mode = #tpu.pipeline_mode<synchronous>, transform_indices = @transform_3, window_bounds = array<i64: 1, 32>}, {pipeline_mode = #tpu.pipeline_mode<synchronous>, transform_indices = @transform_4, window_bounds = array<i64: 1, 32>}, {transform_indices = @transform_5, window_bounds = array<i64: 8, 1>}, {transform_indices = @transform_6, window_bounds = array<i64: 1, 8>}]} {
    %c0 = arith.constant 0 : index
    %c0_0 = arith.constant 0 : index
    %0 = vector.load %arg1[%c0, %c0_0] : memref<8x32xf32, #tpu.memory_space<vmem>>, vector<8x32xf32>
    %1 = arith.truncf %0 : vector<8x32xf32> to vector<8x32xbf16>
    %c0_1 = arith.constant 0 : index
    %c0_2 = arith.constant 0 : index
    %2 = vector.load %arg2[%c0_1, %c0_2] : memref<32x32xbf16, #tpu.memory_space<vmem>>, vector<32x32xbf16>
    %cst = arith.constant dense<0.000000e+00> : vector<8x32xf32>
    %3 = tpu.matmul %1, %2, %cst {dimension_numbers = #tpu.dot_dimension_numbers<[1], [0], [0], [1], [0, 0, 1, 1], [], []>} : vector<8x32xbf16>, vector<32x32xbf16>, vector<8x32xf32> -> vector<8x32xf32>
    %c0_3 = arith.constant 0 : index
    %c0_4 = arith.constant 0 : index
    %4 = vector.load %arg3[%c0_3, %c0_4] : memref<1x32xf32, #tpu.memory_space<vmem>>, vector<1x32xf32>
    %5 = vector.broadcast %4 : vector<1x32xf32> to vector<8x32xf32>
    %6 = arith.addf %3, %5 : vector<8x32xf32>
    %cst_5 = arith.constant dense<0.000000e+00> : vector<8xf32>
    %7 = vector.multi_reduction <add>, %6, %cst_5 [1] : vector<8x32xf32> to vector<8xf32>
    %8 = vector.shape_cast %7 : vector<8xf32> to vector<8x1xf32>
    %cst_6 = arith.constant 3.200000e+01 : f32
    %9 = vector.broadcast %cst_6 : f32 to vector<8x1xf32>
    %10 = arith.divf %8, %9 : vector<8x1xf32>
    %11 = vector.broadcast %10 : vector<8x1xf32> to vector<8x32xf32>
    %12 = arith.subf %6, %11 : vector<8x32xf32>
    %13 = arith.mulf %12, %12 : vector<8x32xf32>
    %cst_7 = arith.constant dense<0.000000e+00> : vector<8xf32>
    %14 = vector.multi_reduction <add>, %13, %cst_7 [1] : vector<8x32xf32> to vector<8xf32>
    %15 = vector.shape_cast %14 : vector<8xf32> to vector<8x1xf32>
    %cst_8 = arith.constant 3.200000e+01 : f32
    %16 = vector.broadcast %cst_8 : f32 to vector<8x1xf32>
    %17 = arith.divf %15, %16 : vector<8x1xf32>
    %cst_9 = arith.constant 9.99999974E-6 : f32
    %18 = vector.broadcast %cst_9 : f32 to vector<8x1xf32>
    %19 = arith.addf %17, %18 : vector<8x1xf32>
    %20 = math.rsqrt %19 : vector<8x1xf32>
    %21 = vector.broadcast %20 : vector<8x1xf32> to vector<8x32xf32>
    %22 = arith.mulf %12, %21 : vector<8x32xf32>
    %c0_10 = arith.constant 0 : index
    %c0_11 = arith.constant 0 : index
    %23 = vector.load %arg4[%c0_10, %c0_11] : memref<1x32xf32, #tpu.memory_space<vmem>>, vector<1x32xf32>
    %24 = vector.broadcast %23 : vector<1x32xf32> to vector<8x32xf32>
    %25 = arith.mulf %22, %24 : vector<8x32xf32>
    %c0_12 = arith.constant 0 : index
    %c0_13 = arith.constant 0 : index
    %26 = vector.load %arg5[%c0_12, %c0_13] : memref<1x32xf32, #tpu.memory_space<vmem>>, vector<1x32xf32>
    %27 = vector.broadcast %26 : vector<1x32xf32> to vector<8x32xf32>
    %28 = arith.addf %25, %27 : vector<8x32xf32>
    %cst_14 = arith.constant dense<0xFF800000> : vector<8xf32>
    %29 = vector.multi_reduction <maximumf>, %28, %cst_14 [1] : vector<8x32xf32> to vector<8xf32>
    %30 = vector.shape_cast %29 : vector<8xf32> to vector<8x1xf32>
    %31 = vector.broadcast %30 : vector<8x1xf32> to vector<8x32xf32>
    %32 = arith.subf %28, %31 : vector<8x32xf32>
    %33 = math.exp %32 : vector<8x32xf32>
    %cst_15 = arith.constant dense<0.000000e+00> : vector<8xf32>
    %34 = vector.multi_reduction <add>, %33, %cst_15 [1] : vector<8x32xf32> to vector<8xf32>
    %35 = vector.shape_cast %34 : vector<8xf32> to vector<8x1xf32>
    %36 = math.log %35 : vector<8x1xf32>
    %37 = tpu.iota {dimensions = array<i32: 1>} : vector<8x32xi32>
    %c0_16 = arith.constant 0 : index
    %c0_17 = arith.constant 0 : index
    %38 = vector.load %arg6[%c0_16, %c0_17] : memref<8x1xi32, #tpu.memory_space<vmem>>, vector<8x1xi32>
    %39 = vector.broadcast %38 : vector<8x1xi32> to vector<8x32xi32>
    %40 = arith.cmpi eq, %37, %39 : vector<8x32xi32>
    %cst_18 = arith.constant 0.000000e+00 : f32
    %41 = vector.broadcast %cst_18 : f32 to vector<8x32xf32>
    %42 = arith.select %40, %32, %41 : vector<8x32xi1>, vector<8x32xf32>
    %cst_19 = arith.constant dense<0.000000e+00> : vector<8xf32>
    %43 = vector.multi_reduction <add>, %42, %cst_19 [1] : vector<8x32xf32> to vector<8xf32>
    %44 = vector.shape_cast %43 : vector<8xf32> to vector<8x1xf32>
    %45 = arith.subf %36, %44 : vector<8x1xf32>
    %cst_20 = arith.constant 1.250000e-01 : f32
    %46 = vector.broadcast %cst_20 : f32 to vector<8x1xf32>
    %47 = arith.mulf %45, %46 : vector<8x1xf32>
    %48 = tpu.transpose %47, [1, 0] : vector<8x1xf32> -> vector<1x8xf32>
    %c0_21 = arith.constant 0 : index
    %c0_22 = arith.constant 0 : index
    %49 = vector.load %arg7[%c0_21, %c0_22] : memref<1x8xf32, #tpu.memory_space<vmem>>, vector<1x8xf32>
    tpu.vector_store %arg7[%c0_21, %c0_22], %48 {strides = array<i32>} : memref<1x8xf32, #tpu.memory_space<vmem>>, vector<1x8xf32>,
    return
  }
  func.func @transform_0(%arg0: i32) -> (i32, i32) {
    %c0_i32 = arith.constant 0 : i32
    %c0_i32_0 = arith.constant 0 : i32
    return %arg0, %c0_i32 : i32, i32
  }
  func.func @transform_1(%arg0: i32) -> (i32, i32) {
    %c0_i32 = arith.constant 0 : i32
    %c0_i32_0 = arith.constant 0 : i32
    %c0_i32_1 = arith.constant 0 : i32
    return %c0_i32, %c0_i32_0 : i32, i32
  }
  func.func @transform_2(%arg0: i32) -> (i32, i32) {
    %c0_i32 = arith.constant 0 : i32
    %c0_i32_0 = arith.constant 0 : i32
    %c0_i32_1 = arith.constant 0 : i32
    return %c0_i32, %c0_i32_0 : i32, i32
  }
  func.func @transform_3(%arg0: i32) -> (i32, i32) {
    %c0_i32 = arith.constant 0 : i32
    %c0_i32_0 = arith.constant 0 : i32
    %c0_i32_1 = arith.constant 0 : i32
    return %c0_i32, %c0_i32_0 : i32, i32
  }
  func.func @transform_4(%arg0: i32) -> (i32, i32) {
    %c0_i32 = arith.constant 0 : i32
    %c0_i32_0 = arith.constant 0 : i32
    %c0_i32_1 = arith.constant 0 : i32
    return %c0_i32, %c0_i32_0 : i32, i32
  }
  func.func @transform_5(%arg0: i32) -> (i32, i32) {
    %c0_i32 = arith.constant 0 : i32
    %c0_i32_0 = arith.constant 0 : i32
    return %arg0, %c0_i32 : i32, i32
  }
  func.func @transform_6(%arg0: i32) -> (i32, i32) {
    %c0_i32 = arith.constant 0 : i32
    %c0_i32_0 = arith.constant 0 : i32
    return %c0_i32, %arg0 : i32, i32
  }
}

module attributes {stable_mosaic.version = 11 : i64} {
  func.func @_fwd_kernel(%arg0: i32, %arg1: memref<8x32xf32, #tpu.memory_space<vmem>>, %arg2: memref<32x32xbf16, #tpu.memory_space<vmem>>, %arg3: memref<1x32xf32, #tpu.memory_space<vmem>>, %arg4: memref<1x32xf32, #tpu.memory_space<vmem>>, %arg5: memref<1x32xf32, #tpu.memory_space<vmem>>, %arg6: memref<8x1xi32, #tpu.memory_space<vmem>>, %arg7: memref<8x1xf32, #tpu.memory_space<vmem>>) attributes {dimension_semantics = [#tpu.dimension_semantics<parallel>], iteration_bounds = array<i64: 1>, scalar_prefetch = 0 : i64, scratch_operands = 0 : i64, tpu.core_type = #tpu.core_type<tc>, window_params = [{transform_indices = @transform_0, window_bounds = array<i64: 8, 32>}, {pipeline_mode = #tpu.pipeline_mode<synchronous>, transform_indices = @transform_1, window_bounds = array<i64: 32, 32>}, {pipeline_mode = #tpu.pipeline_mode<synchronous>, transform_indices = @transform_2, window_bounds = array<i64: 1, 32>}, {pipeline_mode = #tpu.pipeline_mode<synchronous>, transform_indices = @transform_3, window_bounds = array<i64: 1, 32>}, {pipeline_mode = #tpu.pipeline_mode<synchronous>, transform_indices = @transform_4, window_bounds = array<i64: 1, 32>}, {transform_indices = @transform_5, window_bounds = array<i64: 8, 1>}, {transform_indices = @transform_6, window_bounds = array<i64: 8, 1>}]} {
    %c0 = arith.constant 0 : index
    %c0_0 = arith.constant 0 : index
    %0 = vector.load %arg1[%c0, %c0_0] : memref<8x32xf32, #tpu.memory_space<vmem>>, vector<8x32xf32>
    %1 = arith.truncf %0 : vector<8x32xf32> to vector<8x32xbf16>
    %c0_1 = arith.constant 0 : index
    %c0_2 = arith.constant 0 : index
    %2 = vector.load %arg2[%c0_1, %c0_2] : memref<32x32xbf16, #tpu.memory_space<vmem>>, vector<32x32xbf16>
    %cst = arith.constant dense<0.000000e+00> : vector<8x32xf32>
    %3 = tpu.matmul %1, %2, %cst {dimension_numbers = #tpu.dot_dimension_numbers<[1], [0], [0], [1], [0, 0, 1, 1], [], []>} : vector<8x32xbf16>, vector<32x32xbf16>, vector<8x32xf32> -> vector<8x32xf32>
    %c0_3 = arith.constant 0 : index
    %c0_4 = arith.constant 0 : index
    %4 = vector.load %arg3[%c0_3, %c0_4] : memref<1x32xf32, #tpu.memory_space<vmem>>, vector<1x32xf32>
    %5 = vector.broadcast %4 : vector<1x32xf32> to vector<8x32xf32>
    %6 = arith.addf %3, %5 : vector<8x32xf32>
    %cst_5 = arith.constant dense<0.000000e+00> : vector<8xf32>
    %7 = vector.multi_reduction <add>, %6, %cst_5 [1] : vector<8x32xf32> to vector<8xf32>
    %8 = vector.shape_cast %7 : vector<8xf32> to vector<8x1xf32>
    %cst_6 = arith.constant 3.200000e+01 : f32
    %9 = vector.broadcast %cst_6 : f32 to vector<8x1xf32>
    %10 = arith.divf %8, %9 : vector<8x1xf32>
    %11 = vector.broadcast %10 : vector<8x1xf32> to vector<8x32xf32>
    %12 = arith.subf %6, %11 : vector<8x32xf32>
    %13 = arith.mulf %12, %12 : vector<8x32xf32>
    %cst_7 = arith.constant dense<0.000000e+00> : vector<8xf32>
    %14 = vector.multi_reduction <add>, %13, %cst_7 [1] : vector<8x32xf32> to vector<8xf32>
    %15 = vector.shape_cast %14 : vector<8xf32> to vector<8x1xf32>
    %cst_8 = arith.constant 3.200000e+01 : f32
    %16 = vector.broadcast %cst_8 : f32 to vector<8x1xf32>
    %17 = arith.divf %15, %16 : vector<8x1xf32>
    %cst_9 = arith.constant 9.99999974E-6 : f32
    %18 = vector.broadcast %cst_9 : f32 to vector<8x1xf32>
    %19 = arith.addf %17, %18 : vector<8x1xf32>
    %20 = math.rsqrt %19 : vector<8x1xf32>
    %21 = vector.broadcast %20 : vector<8x1xf32> to vector<8x32xf32>
    %22 = arith.mulf %12, %21 : vector<8x32xf32>
    %c0_10 = arith.constant 0 : index
    %c0_11 = arith.constant 0 : index
    %23 = vector.load %arg4[%c0_10, %c0_11] : memref<1x32xf32, #tpu.memory_space<vmem>>, vector<1x32xf32>
    %24 = vector.broadcast %23 : vector<1x32xf32> to vector<8x32xf32>
    %25 = arith.mulf %22, %24 : vector<8x32xf32>
    %c0_12 = arith.constant 0 : index
    %c0_13 = arith.constant 0 : index
    %26 = vector.load %arg5[%c0_12, %c0_13] : memref<1x32xf32, #tpu.memory_space<vmem>>, vector<1x32xf32>
    %27 = vector.broadcast %26 : vector<1x32xf32> to vector<8x32xf32>
    %28 = arith.addf %25, %27 : vector<8x32xf32>
    %cst_14 = arith.constant dense<0xFF800000> : vector<8xf32>
    %29 = vector.multi_reduction <maximumf>, %28, %cst_14 [1] : vector<8x32xf32> to vector<8xf32>
    %30 = vector.shape_cast %29 : vector<8xf32> to vector<8x1xf32>
    %31 = vector.broadcast %30 : vector<8x1xf32> to vector<8x32xf32>
    %32 = arith.subf %28, %31 : vector<8x32xf32>
    %33 = math.exp %32 : vector<8x32xf32>
    %cst_15 = arith.constant dense<0.000000e+00> : vector<8xf32>
    %34 = vector.multi_reduction <add>, %33, %cst_15 [1] : vector<8x32xf32> to vector<8xf32>
    %35 = vector.shape_cast %34 : vector<8xf32> to vector<8x1xf32>
    %36 = math.log %35 : vector<8x1xf32>
    %37 = tpu.iota {dimensions = array<i32: 1>} : vector<8x32xi32>
    %c0_16 = arith.constant 0 : index
    %c0_17 = arith.constant 0 : index
    %38 = vector.load %arg6[%c0_16, %c0_17] : memref<8x1xi32, #tpu.memory_space<vmem>>, vector<8x1xi32>
    %39 = vector.broadcast %38 : vector<8x1xi32> to vector<8x32xi32>
    %40 = arith.cmpi eq, %37, %39 : vector<8x32xi32>
    %cst_18 = arith.constant 0.000000e+00 : f32
    %41 = vector.broadcast %cst_18 : f32 to vector<8x32xf32>
    %42 = arith.select %40, %32, %41 : vector<8x32xi1>, vector<8x32xf32>
    %cst_19 = arith.constant dense<0.000000e+00> : vector<8xf32>
    %43 = vector.multi_reduction <add>, %42, %cst_19 [1] : vector<8x32xf32> to vector<8xf32>
    %44 = vector.shape_cast %43 : vector<8xf32> to vector<8x1xf32>
    %45 = arith.subf %36, %44 : vector<8x1xf32>
    %cst_20 = arith.constant 1.250000e-01 : f32
    %46 = vector.broadcast %cst_20 : f32 to vector<8x1xf32>
    %47 = arith.mulf %45, %46 : vector<8x1xf32>
    %c0_21 = arith.constant 0 : index
    %c0_22 = arith.constant 0 : index
    %48 = vector.load %arg7[%c0_21, %c0_22] : memref<8x1xf32, #tpu.memory_space<vmem>>, vector<8x1xf32>
    tpu.vector_store %arg7[%c0_21, %c0_22], %47 {strides = array<i32>} : memref<8x1xf32, #tpu.memory_space<vmem>>, vector<8x1xf32>,
    return
  }
  func.func @transform_0(%arg0: i32) -> (i32, i32) {
    %c0_i32 = arith.constant 0 : i32
    %c0_i32_0 = arith.constant 0 : i32
    return %arg0, %c0_i32 : i32, i32
  }
  func.func @transform_1(%arg0: i32) -> (i32, i32) {
    %c0_i32 = arith.constant 0 : i32
    %c0_i32_0 = arith.constant 0 : i32
    %c0_i32_1 = arith.constant 0 : i32
    return %c0_i32, %c0_i32_0 : i32, i32
  }
  func.func @transform_2(%arg0: i32) -> (i32, i32) {
    %c0_i32 = arith.constant 0 : i32
    %c0_i32_0 = arith.constant 0 : i32
    %c0_i32_1 = arith.constant 0 : i32
    return %c0_i32, %c0_i32_0 : i32, i32
  }
  func.func @transform_3(%arg0: i32) -> (i32, i32) {
    %c0_i32 = arith.constant 0 : i32
    %c0_i32_0 = arith.constant 0 : i32
    %c0_i32_1 = arith.constant 0 : i32
    return %c0_i32, %c0_i32_0 : i32, i32
  }
  func.func @transform_4(%arg0: i32) -> (i32, i32) {
    %c0_i32 = arith.constant 0 : i32
    %c0_i32_0 = arith.constant 0 : i32
    %c0_i32_1 = arith.constant 0 : i32
    return %c0_i32, %c0_i32_0 : i32, i32
  }
  func.func @transform_5(%arg0: i32) -> (i32, i32) {
    %c0_i32 = arith.constant 0 : i32
    %c0_i32_0 = arith.constant 0 : i32
    return %arg0, %c0_i32 : i32, i32
  }
  func.func @transform_6(%arg0: i32) -> (i32, i32) {
    %c0_i32 = arith.constant 0 : i32
    %c0_i32_0 = arith.constant 0 : i32
    return %arg0, %c0_i32 : i32, i32
  }
}

</mosaic_0001>

<llo_original>
// kernel: tpu_custom_call.1
$region0: #{tpu_custom_call.1}
  #allocation0 [shape = 'u32[]', space=smem, size = 0x4, offset = 0x4, fixed_abs, tag = 'smem constant byte address 0x4 - core index']
  #allocation1 [shape = 'u32[144,128]{1,0:T(1,128)}', space=vmem, size = 0x12000, scoped, tag = 'internal scratch']
  %s0 = inlined_call_operand.vmem [shape: f32[8,32], index: 0, kind: input, shape index: {}]
  %s1 = inlined_call_operand.hbm [shape: bf16[32,32], index: 1, kind: input, shape index: {}]
  %s2 = inlined_call_operand.vmem [shape: f32[1,32], index: 2, kind: input, shape index: {}]
  %s3 = inlined_call_operand.vmem [shape: f32[1,32], index: 3, kind: input, shape index: {}]
  %s4 = inlined_call_operand.vmem [shape: f32[1,32], index: 4, kind: input, shape index: {}]
  %s5 = inlined_call_operand.vmem [shape: s32[8,1], index: 5, kind: input, shape index: {}]
  %s6 = inlined_call_operand.hbm [shape: f32[1,8], index: 6, kind: output, shape index: {}]
  %s7 = sld [smem:[#allocation0]]
  $region38: #{tpu_custom_call.1} parent=0
    _
  %s9 = ssub.s32 1, %s7
  %s10 = scalar_select 0, %s9, %s7
  $region1: #{tpu_custom_call.1} parent=0
    #allocation2 [shape = 'u8[8192]{0}', space=vmem, size = 0x2000, scoped, tag = 'input window, operand 1, single buffered']
    #allocation3 [shape = 's32[1]{0}', space=sflag, size = 0x4, scoped, tag = 'scoped memory for tpu_custom_call.1']
    #allocation4 [shape = 's32[1]{0}', space=sflag, size = 0x4, scoped, tag = 'scoped memory for tpu_custom_call.1']
    #allocation5 [shape = 'u8[512]{0}', space=vmem, size = 0x400, scoped, tag = 'output window, operand 0, single buffered']
    %11 = vsyncpa [#allocation3], 0
    %12 = vsyncpa [#allocation4], 0
    // Predicated region
    $region2: #{tpu_custom_call.1} parent=1 // pred_check
      _
    $region3: #{tpu_custom_call.1} parent=1 // pred_check_branch
      %14 = sbr.rel (0) target = $region5
    $region4: #{tpu_custom_call.1} parent=1 // pred_region
      _
    $region5: #{tpu_custom_call.1} parent=1 // pred_fallthru
      _
    // Predicated region
    $region6: #{tpu_custom_call.1} parent=1 // pred_check
      _
    $region7: #{tpu_custom_call.1} parent=1 // pred_check_branch
      %16 = sbr.rel (0) target = $region9
    $region8: #{tpu_custom_call.1} parent=1 // pred_region
      %s18 = ssub.s32 256, 256
      %19 = vsyncadd [#allocation3], %s18
      %s20 = sshll.u32 [#allocation2], 4
      %s21 = int_to_ptr.vmem [resolvable:$true] %s20
      %26 = dma.hbm_to_vmem [thread:$0]  %s1, 256, %s21, [#allocation3], 64, 64, 4
    $region9: #{tpu_custom_call.1} parent=1 // pred_fallthru
      _
    // Predicated region
    $region10: #{tpu_custom_call.1} parent=1 // pred_check
      _
    $region11: #{tpu_custom_call.1} parent=1 // pred_check_branch
      %28 = sbr.rel (0) target = $region13
    $region12: #{tpu_custom_call.1} parent=1 // pred_region
      _
    $region13: #{tpu_custom_call.1} parent=1 // pred_fallthru
      _
    // Predicated region
    $region14: #{tpu_custom_call.1} parent=1 // pred_check
      _
    $region15: #{tpu_custom_call.1} parent=1 // pred_check_branch
      %30 = sbr.rel (0) target = $region17
    $region16: #{tpu_custom_call.1} parent=1 // pred_region
      _
    $region17: #{tpu_custom_call.1} parent=1 // pred_fallthru
      _
    // Predicated region
    $region18: #{tpu_custom_call.1} parent=1 // pred_check
      _
    $region19: #{tpu_custom_call.1} parent=1 // pred_check_branch
      %32 = sbr.rel (0) target = $region21
    $region20: #{tpu_custom_call.1} parent=1 // pred_region
      _
    $region21: #{tpu_custom_call.1} parent=1 // pred_fallthru
      _
    // Predicated region
    $region22: #{tpu_custom_call.1} parent=1 // pred_check
      _
    $region23: #{tpu_custom_call.1} parent=1 // pred_check_branch
      %34 = sbr.rel (0) target = $region25
    $region24: #{tpu_custom_call.1} parent=1 // pred_region
      _
    $region25: #{tpu_custom_call.1} parent=1 // pred_fallthru
      _
    // Predicated region
    $region26: #{tpu_custom_call.1} parent=1 // pred_check
      _
    $region27: #{tpu_custom_call.1} parent=1 // pred_check_branch
      %36 = sbr.rel (0) target = $region29
    $region28: #{tpu_custom_call.1} parent=1 // pred_region
      %37 = dma.done [#allocation3], 256
    $region29: #{tpu_custom_call.1} parent=1 // pred_fallthru
      _
    %v39 = vld [vmem:[%s0] sm:$0xff]
    %v40 = vpack.c.bf16 %v39, %v39
    %v41 = vld [vmem:[#allocation2] sm:$0xf]
    %v42 = vld [vmem:[#allocation2 + $0x4] sm:$0xf]
    %v43 = vld [vmem:[#allocation2 + $0x8] sm:$0xf]
    %v44 = vld [vmem:[#allocation2 + $0xc] sm:$0xf]
    %v45 = vld [vmem:[%s2] sm:$0x1]
    %v47 = vlaneseq
    %v48 = vshrl.u32 %v47, 7
    %v49 = vsub.s32 0, %v48
    %v50 = vrot.slane %v45, %v49
    %v56 = vunpack.c.l.b16 %v41
    %v57 = vunpack.c.l.b16 %v42
    %v58 = vunpack.c.l.b16 %v43
    %v59 = vunpack.c.l.b16 %v44
    %v60 = vpack.c.b16 %v57, %v56
    %v61 = vpack.c.b16 %v59, %v58
    %vm64 = vcmask 261120
    %v66 = vsel %vm64, %v40, 0
    %68 = vmatprep.subr.bf16.mxu0 0
    %69 = vmatpush1.bf16.msra.mxu0 %v60
    %70 = vmatprep.subr.bf16.mxu0 0
    %71 = vmatpush1.bf16.msra.mxu0 %v61
    %72 = vmatprep.subr.bf16.mxu0 0
    %73 = vmatpush1.bf16.msra.mxu0 0
    %74 = vmatprep.subr.bf16.mxu0 0
    %75 = vmatpush1.bf16.msra.mxu0 0
    %76 = vmatprep.subr.bf16.mxu0 0
    %77 = vmatpush1.bf16.msra.mxu0 0
    %78 = vmatprep.subr.bf16.mxu0 0
    %79 = vmatpush1.bf16.msra.mxu0 0
    %80 = vmatprep.subr.bf16.mxu0 0
    %81 = vmatpush1.bf16.msra.mxu0 0
    %82 = vmatprep.subr.bf16.mxu0 0
    %83 = vmatpush1.bf16.msra.mxu0 0
    %84 = vmatprep.subr.bf16.mxu0 0
    %85 = vmatpush1.bf16.msra.mxu0 0
    %86 = vmatprep.subr.bf16.mxu0 0
    %87 = vmatpush1.bf16.msra.mxu0 0
    %88 = vmatprep.subr.bf16.mxu0 0
    %89 = vmatpush1.bf16.msra.mxu0 0
    %90 = vmatprep.subr.bf16.mxu0 0
    %91 = vmatpush1.bf16.msra.mxu0 0
    %92 = vmatprep.subr.bf16.mxu0 0
    %93 = vmatpush1.bf16.msra.mxu0 0
    %94 = vmatprep.subr.bf16.mxu0 0
    %95 = vmatpush1.bf16.msra.mxu0 0
    %96 = vmatprep.subr.bf16.mxu0 0
    %97 = vmatpush1.bf16.msra.mxu0 0
    %98 = vmatprep.subr.bf16.mxu0 0
    %99 = vmatpush1.bf16.msra.mxu0 0
    %100 = vmatprep.mubr.bf16.mxu0 0
    %101 = vmatmul.mubr.bf16.gmra.mrb[0].mxu0 %v66
    %v102 = vpop.f32.mrb[0].mxu0
    %v103 = vadd.f32 %v50, %v102
    %v104 = vpop.f32.mrb[0].mxu0
    %v105 = vpop.f32.mrb[0].mxu0
    %v106 = vpop.f32.mrb[0].mxu0
    %107 = vdwg.mxu0
    %v108 = vsel %vm64, %v103, 0.0
    %109 = vadd.xlane.f32.xlu0 %v108
    %v110 = vpop.xlane.xlu0 %109
    %v111 = vrcp.pop 32.0
    %v112 = vmul.f32 %v110, %v111
    %v113 = vsub.f32 %v103, %v112
    %v114 = vmul.f32 %v113, %v113
    %v115 = vsel %vm64, %v114, 0.0
    %116 = vadd.xlane.f32.xlu0 %v115
    %v117 = vpop.xlane.xlu0 %116
    %v118 = vmul.f32 %v117, %v111
    %v119 = vadd.f32 %v118, 1e-05
    %v120 = vrsqrt.pop %v119
    %v121 = vmul.f32 %v113, %v120
    %v122 = vld [vmem:[%s3] sm:$0x1]
    %v124 = vlaneseq
    %v125 = vshrl.u32 %v124, 7
    %v126 = vsub.s32 0, %v125
    %v127 = vrot.slane %v122, %v126
    %v129 = vmul.f32 %v121, %v127
    %v130 = vld [vmem:[%s4] sm:$0x1]
    %v132 = vlaneseq
    %v133 = vshrl.u32 %v132, 7
    %v134 = vsub.s32 0, %v133
    %v135 = vrot.slane %v130, %v134
    %v137 = vadd.f32 %v129, %v135
    %v138 = vsel %vm64, %v137, -inf
    %139 = vmax.xlane.f32.xlu0 %v138
    %v140 = vpop.xlane.xlu0 %139
    %v141 = vsub.f32 %v137, %v140
    %v142 = vmul.f32 %v141, 1.442695
    %v143 = vpow.pop %v142
    %v144 = vsel %vm64, %v143, 0.0
    %145 = vadd.xlane.f32.xlu0 %v144
    %v146 = vpop.xlane.xlu0 %145
    %v147 = vlog2.pop %v146
    %v148 = vmul.f32 %v147, 0.6931472
    %v149 = vlaneseq
    %v150 = vand.u32 %v149, 127
    %v151 = vld [vmem:[%s5] sm:$0xff]
    %152 = vset.pattern.permute.xlu0 0
    %153 = vperm.xlu0 %152, %v151
    %v154 = vpop.permute.xlu0 %153
    %vm155 = vcmp.eq.s32.totalorder %v150, %v154
    %v156 = vsel %vm155, %v141, 0.0
    %v157 = vsel %vm64, %v156, 0.0
    %158 = vadd.xlane.f32.xlu0 %v157
    %v159 = vpop.xlane.xlu0 %158
    %v160 = vsub.f32 %v148, %v159
    %v161 = vmul.f32 %v160, 0.125
    %162 = vxpose.xlu0.b32.start [1/16] %v161, 128
    %163 = vxpose.xlu0.b32.cont [2/16] 0.0, 128
    %164 = vxpose.xlu0.b32.cont [3/16] 0.0, 128
    %165 = vxpose.xlu0.b32.cont [4/16] 0.0, 128
    %166 = vxpose.xlu0.b32.cont [5/16] 0.0, 128
    %167 = vxpose.xlu0.b32.cont [6/16] 0.0, 128
    %168 = vxpose.xlu0.b32.cont [7/16] 0.0, 128
    %169 = vxpose.xlu0.b32.cont [8/16] 0.0, 128
    %170 = vxpose.xlu0.b32.cont [9/16] 0.0, 128
    %171 = vxpose.xlu0.b32.cont [10/16] 0.0, 128
    %172 = vxpose.xlu0.b32.cont [11/16] 0.0, 128
    %173 = vxpose.xlu0.b32.cont [12/16] 0.0, 128
    %174 = vxpose.xlu0.b32.cont [13/16] 0.0, 128
    %175 = vxpose.xlu0.b32.cont [14/16] 0.0, 128
    %176 = vxpose.xlu0.b32.cont [15/16] 0.0, 128
    %177 = vxpose.xlu0.b32.end [16/16] 0.0, 128
    %v178 = vpop.trf.xlu0
    %v179 = vpop.trf.xlu0
    %v180 = vpop.trf.xlu0
    %v181 = vpop.trf.xlu0
    %v182 = vpop.trf.xlu0
    %v183 = vpop.trf.xlu0
    %v184 = vpop.trf.xlu0
    %v185 = vpop.trf.xlu0
    %v186 = vpop.trf.xlu0
    %v187 = vpop.trf.xlu0
    %v188 = vpop.trf.xlu0
    %v189 = vpop.trf.xlu0
    %v190 = vpop.trf.xlu0
    %v191 = vpop.trf.xlu0
    %v192 = vpop.trf.xlu0
    %v193 = vpop.trf.xlu0
    %vm194 = vcmask 57344
    %195 = vst.msk [vmem:[#allocation5] sm:$0x1] %vm194, %v178
    // Predicated region
    $region30: #{tpu_custom_call.1} parent=1 // pred_check
      _
    $region31: #{tpu_custom_call.1} parent=1 // pred_check_branch
      %197 = sbr.rel (0) target = $region33
    $region32: #{tpu_custom_call.1} parent=1 // pred_region
      %s199 = ssub.s32 16, 16
      %200 = vsyncadd [#allocation4], %s199
      %s202 = sshll.u32 [#allocation5], 4
      %s203 = int_to_ptr.vmem [resolvable:$true] %s202
      %205 = dma.vmem_to_hbm [thread:$0]  %s203, 16, %s6, [#allocation4]
    $region33: #{tpu_custom_call.1} parent=1 // pred_fallthru
      _
    // Predicated region
    $region34: #{tpu_custom_call.1} parent=1 // pred_check
      _
    $region35: #{tpu_custom_call.1} parent=1 // pred_check_branch
      %207 = sbr.rel (0) target = $region37
    $region36: #{tpu_custom_call.1} parent=1 // pred_region
      %208 = dma.done [#allocation4], 16
    $region37: #{tpu_custom_call.1} parent=1 // pred_fallthru
      _
    %209 = vsyncpa [#allocation3], 1
    %210 = vsyncpa [#allocation4], 1

// kernel: tpu_custom_call.1
$region0: #{tpu_custom_call.1}
  #allocation0 [shape = 'u32[]', space=smem, size = 0x4, offset = 0x4, fixed_abs, tag = 'smem constant byte address 0x4 - core index']
  #allocation1 [shape = 'u32[144,128]{1,0:T(1,128)}', space=vmem, size = 0x12000, scoped, tag = 'internal scratch']
  %s0 = inlined_call_operand.vmem [shape: f32[8,32], index: 0, kind: input, shape index: {}]
  %s1 = inlined_call_operand.hbm [shape: bf16[32,32], index: 1, kind: input, shape index: {}]
  %s2 = inlined_call_operand.vmem [shape: f32[1,32], index: 2, kind: input, shape index: {}]
  %s3 = inlined_call_operand.vmem [shape: f32[1,32], index: 3, kind: input, shape index: {}]
  %s4 = inlined_call_operand.vmem [shape: f32[1,32], index: 4, kind: input, shape index: {}]
  %s5 = inlined_call_operand.vmem [shape: s32[8,1], index: 5, kind: input, shape index: {}]
  %s6 = inlined_call_operand.vmem [shape: f32[8,1], index: 6, kind: output, shape index: {}]
  %s7 = sld [smem:[#allocation0]]
  $region38: #{tpu_custom_call.1} parent=0
    _
  %s9 = ssub.s32 1, %s7
  %s10 = scalar_select 0, %s9, %s7
  $region1: #{tpu_custom_call.1} parent=0
    #allocation2 [shape = 'u8[8192]{0}', space=vmem, size = 0x2000, scoped, tag = 'input window, operand 1, single buffered']
    #allocation3 [shape = 's32[1]{0}', space=sflag, size = 0x4, scoped, tag = 'scoped memory for tpu_custom_call.1']
    %11 = vsyncpa [#allocation3], 0
    // Predicated region
    $region2: #{tpu_custom_call.1} parent=1 // pred_check
      _
    $region3: #{tpu_custom_call.1} parent=1 // pred_check_branch
      %13 = sbr.rel (0) target = $region5
    $region4: #{tpu_custom_call.1} parent=1 // pred_region
      _
    $region5: #{tpu_custom_call.1} parent=1 // pred_fallthru
      _
    // Predicated region
    $region6: #{tpu_custom_call.1} parent=1 // pred_check
      _
    $region7: #{tpu_custom_call.1} parent=1 // pred_check_branch
      %15 = sbr.rel (0) target = $region9
    $region8: #{tpu_custom_call.1} parent=1 // pred_region
      %s17 = ssub.s32 256, 256
      %18 = vsyncadd [#allocation3], %s17
      %s19 = sshll.u32 [#allocation2], 4
      %s20 = int_to_ptr.vmem [resolvable:$true] %s19
      %25 = dma.hbm_to_vmem [thread:$0]  %s1, 256, %s20, [#allocation3], 64, 64, 4
    $region9: #{tpu_custom_call.1} parent=1 // pred_fallthru
      _
    // Predicated region
    $region10: #{tpu_custom_call.1} parent=1 // pred_check
      _
    $region11: #{tpu_custom_call.1} parent=1 // pred_check_branch
      %27 = sbr.rel (0) target = $region13
    $region12: #{tpu_custom_call.1} parent=1 // pred_region
      _
    $region13: #{tpu_custom_call.1} parent=1 // pred_fallthru
      _
    // Predicated region
    $region14: #{tpu_custom_call.1} parent=1 // pred_check
      _
    $region15: #{tpu_custom_call.1} parent=1 // pred_check_branch
      %29 = sbr.rel (0) target = $region17
    $region16: #{tpu_custom_call.1} parent=1 // pred_region
      _
    $region17: #{tpu_custom_call.1} parent=1 // pred_fallthru
      _
    // Predicated region
    $region18: #{tpu_custom_call.1} parent=1 // pred_check
      _
    $region19: #{tpu_custom_call.1} parent=1 // pred_check_branch
      %31 = sbr.rel (0) target = $region21
    $region20: #{tpu_custom_call.1} parent=1 // pred_region
      _
    $region21: #{tpu_custom_call.1} parent=1 // pred_fallthru
      _
    // Predicated region
    $region22: #{tpu_custom_call.1} parent=1 // pred_check
      _
    $region23: #{tpu_custom_call.1} parent=1 // pred_check_branch
      %33 = sbr.rel (0) target = $region25
    $region24: #{tpu_custom_call.1} parent=1 // pred_region
      _
    $region25: #{tpu_custom_call.1} parent=1 // pred_fallthru
      _
    // Predicated region
    $region26: #{tpu_custom_call.1} parent=1 // pred_check
      _
    $region27: #{tpu_custom_call.1} parent=1 // pred_check_branch
      %35 = sbr.rel (0) target = $region29
    $region28: #{tpu_custom_call.1} parent=1 // pred_region
      %36 = dma.done [#allocation3], 256
    $region29: #{tpu_custom_call.1} parent=1 // pred_fallthru
      _
    %v38 = vld [vmem:[%s0] sm:$0xff]
    %v39 = vpack.c.bf16 %v38, %v38
    %v40 = vld [vmem:[#allocation2] sm:$0xf]
    %v41 = vld [vmem:[#allocation2 + $0x4] sm:$0xf]
    %v42 = vld [vmem:[#allocation2 + $0x8] sm:$0xf]
    %v43 = vld [vmem:[#allocation2 + $0xc] sm:$0xf]
    %v44 = vld [vmem:[%s2] sm:$0x1]
    %v46 = vlaneseq
    %v47 = vshrl.u32 %v46, 7
    %v48 = vsub.s32 0, %v47
    %v49 = vrot.slane %v44, %v48
    %v55 = vunpack.c.l.b16 %v40
    %v56 = vunpack.c.l.b16 %v41
    %v57 = vunpack.c.l.b16 %v42
    %v58 = vunpack.c.l.b16 %v43
    %v59 = vpack.c.b16 %v56, %v55
    %v60 = vpack.c.b16 %v58, %v57
    %vm63 = vcmask 261120
    %v65 = vsel %vm63, %v39, 0
    %67 = vmatprep.subr.bf16.mxu0 0
    %68 = vmatpush1.bf16.msra.mxu0 %v59
    %69 = vmatprep.subr.bf16.mxu0 0
    %70 = vmatpush1.bf16.msra.mxu0 %v60
    %71 = vmatprep.subr.bf16.mxu0 0
    %72 = vmatpush1.bf16.msra.mxu0 0
    %73 = vmatprep.subr.bf16.mxu0 0
    %74 = vmatpush1.bf16.msra.mxu0 0
    %75 = vmatprep.subr.bf16.mxu0 0
    %76 = vmatpush1.bf16.msra.mxu0 0
    %77 = vmatprep.subr.bf16.mxu0 0
    %78 = vmatpush1.bf16.msra.mxu0 0
    %79 = vmatprep.subr.bf16.mxu0 0
    %80 = vmatpush1.bf16.msra.mxu0 0
    %81 = vmatprep.subr.bf16.mxu0 0
    %82 = vmatpush1.bf16.msra.mxu0 0
    %83 = vmatprep.subr.bf16.mxu0 0
    %84 = vmatpush1.bf16.msra.mxu0 0
    %85 = vmatprep.subr.bf16.mxu0 0
    %86 = vmatpush1.bf16.msra.mxu0 0
    %87 = vmatprep.subr.bf16.mxu0 0
    %88 = vmatpush1.bf16.msra.mxu0 0
    %89 = vmatprep.subr.bf16.mxu0 0
    %90 = vmatpush1.bf16.msra.mxu0 0
    %91 = vmatprep.subr.bf16.mxu0 0
    %92 = vmatpush1.bf16.msra.mxu0 0
    %93 = vmatprep.subr.bf16.mxu0 0
    %94 = vmatpush1.bf16.msra.mxu0 0
    %95 = vmatprep.subr.bf16.mxu0 0
    %96 = vmatpush1.bf16.msra.mxu0 0
    %97 = vmatprep.subr.bf16.mxu0 0
    %98 = vmatpush1.bf16.msra.mxu0 0
    %99 = vmatprep.mubr.bf16.mxu0 0
    %100 = vmatmul.mubr.bf16.gmra.mrb[0].mxu0 %v65
    %v101 = vpop.f32.mrb[0].mxu0
    %v102 = vadd.f32 %v49, %v101
    %v103 = vpop.f32.mrb[0].mxu0
    %v104 = vpop.f32.mrb[0].mxu0
    %v105 = vpop.f32.mrb[0].mxu0
    %106 = vdwg.mxu0
    %v107 = vsel %vm63, %v102, 0.0
    %108 = vadd.xlane.f32.xlu0 %v107
    %v109 = vpop.xlane.xlu0 %108
    %v110 = vrcp.pop 32.0
    %v111 = vmul.f32 %v109, %v110
    %v112 = vsub.f32 %v102, %v111
    %v113 = vmul.f32 %v112, %v112
    %v114 = vsel %vm63, %v113, 0.0
    %115 = vadd.xlane.f32.xlu0 %v114
    %v116 = vpop.xlane.xlu0 %115
    %v117 = vmul.f32 %v116, %v110
    %v118 = vadd.f32 %v117, 1e-05
    %v119 = vrsqrt.pop %v118
    %v120 = vmul.f32 %v112, %v119
    %v121 = vld [vmem:[%s3] sm:$0x1]
    %v123 = vlaneseq
    %v124 = vshrl.u32 %v123, 7
    %v125 = vsub.s32 0, %v124
    %v126 = vrot.slane %v121, %v125
    %v128 = vmul.f32 %v120, %v126
    %v129 = vld [vmem:[%s4] sm:$0x1]
    %v131 = vlaneseq
    %v132 = vshrl.u32 %v131, 7
    %v133 = vsub.s32 0, %v132
    %v134 = vrot.slane %v129, %v133
    %v136 = vadd.f32 %v128, %v134
    %v137 = vsel %vm63, %v136, -inf
    %138 = vmax.xlane.f32.xlu0 %v137
    %v139 = vpop.xlane.xlu0 %138
    %v140 = vsub.f32 %v136, %v139
    %v141 = vmul.f32 %v140, 1.442695
    %v142 = vpow.pop %v141
    %v143 = vsel %vm63, %v142, 0.0
    %144 = vadd.xlane.f32.xlu0 %v143
    %v145 = vpop.xlane.xlu0 %144
    %v146 = vlog2.pop %v145
    %v147 = vmul.f32 %v146, 0.6931472
    %v148 = vlaneseq
    %v149 = vand.u32 %v148, 127
    %v150 = vld [vmem:[%s5] sm:$0xff]
    %151 = vset.pattern.permute.xlu0 0
    %152 = vperm.xlu0 %151, %v150
    %v153 = vpop.permute.xlu0 %152
    %vm154 = vcmp.eq.s32.totalorder %v149, %v153
    %v155 = vsel %vm154, %v140, 0.0
    %v156 = vsel %vm63, %v155, 0.0
    %157 = vadd.xlane.f32.xlu0 %v156
    %v158 = vpop.xlane.xlu0 %157
    %v159 = vsub.f32 %v147, %v158
    %v160 = vmul.f32 %v159, 0.125
    %vm161 = vcmask 7168
    %162 = vst.msk [vmem:[%s6] sm:$0xff] %vm161, %v160
    // Predicated region
    $region30: #{tpu_custom_call.1} parent=1 // pred_check
      _
    $region31: #{tpu_custom_call.1} parent=1 // pred_check_branch
      %164 = sbr.rel (0) target = $region33
    $region32: #{tpu_custom_call.1} parent=1 // pred_region
      _
    $region33: #{tpu_custom_call.1} parent=1 // pred_fallthru
      _
    // Predicated region
    $region34: #{tpu_custom_call.1} parent=1 // pred_check
      _
    $region35: #{tpu_custom_call.1} parent=1 // pred_check_branch
      %166 = sbr.rel (0) target = $region37
    $region36: #{tpu_custom_call.1} parent=1 // pred_region
      _
    $region37: #{tpu_custom_call.1} parent=1 // pred_fallthru
      _
    %167 = vsyncpa [#allocation3], 1

</llo_original>
